<compile_context>
chip_gen: v7x
topology: tpu7x:2x2x1
jax: 0.10.0
libtpu: 0.0.40
codegen_flags: <defaults>
</compile_context>

<pallas_src>
import jax
import jax.numpy as jnp
from jax import lax
from jax.experimental import pallas as pl
from jax.experimental.pallas import tpu as pltpu


# ---------------------------------------------------------------------------
# Kernel 1: conv-as-matmul (contraction K = 9*Cin, lane-padded) fused with
# LeakyReLU(0.2) and per-tile BatchNorm statistics.
#   p_ref  : (tm, Kp)        bf16 im2col patch rows
#   w_ref  : (Kp, Cp)        bf16 reshaped conv weight (loop-invariant)
#   o_ref  : (tm, Cp)        bf16 activation tile
#   sum_ref/ssq_ref : (1, 1, Cp) f32 per-tile channel sum / sum of squares
# ---------------------------------------------------------------------------
def conv_lrelu_stats_kernel(p_ref, w_ref, o_ref, sum_ref, ssq_ref):
    acc = jnp.dot(p_ref[...], w_ref[...], preferred_element_type=jnp.float32)
    y = jnp.where(acc >= 0.0, acc, 0.2 * acc)                  # LeakyReLU(0.2)
    o_ref[...] = y.astype(o_ref.dtype)
    cp = y.shape[1]
    # Zero-padded rows / channels contribute exactly zero to the sums.
    sum_ref[...] = jnp.sum(y, axis=0, keepdims=True).reshape(1, 1, cp)
    ssq_ref[...] = jnp.sum(y * y, axis=0, keepdims=True).reshape(1, 1, cp)


# ---------------------------------------------------------------------------
# Kernel 2: fused BatchNorm + Dropout2d as a per-(sample, channel) FMA, with
# the NHWC -> NCHW transpose done in-kernel so the output is written
# channel-major directly (no trailing XLA transpose over the activation).
#   y_ref : (1, tS, Cp) bf16    a_ref/b_ref : (1, 1, Cp) f32
#   o_ref : (1, C, tS)  f32
# ---------------------------------------------------------------------------
def bn_drop_to_nchw_kernel(y_ref, a_ref, b_ref, o_ref):
    z = y_ref[0].astype(jnp.float32) * a_ref[0] + b_ref[0]     # (tS, Cp)
    zt = jnp.transpose(z)                                      # (Cp, tS) on XLU
    o_ref[0] = zt[: o_ref.shape[1], :]


# ---------------------------------------------------------------------------
# tiling helpers
# ---------------------------------------------------------------------------
def _round_up(x, m):
    return (x + m - 1) // m * m


def _pick_tile_m(M, Kp, Cp):
    # ~16 MiB working set for the double-buffered bf16 patch/out tiles plus the
    # (worst-case double-buffered) weight block; stays inside the 32 MiB scoped
    # VMEM limit and leaves headroom for two v7x cores sharing 64 MiB.
    budget = max(16 * 1024 * 1024 - 2 * Kp * Cp * 2, 2 * 1024 * 1024)
    per_row = 2 * (Kp + Cp) * 2            # bf16 in + out, double-buffered
    tm = max(16, min(1024, budget // max(per_row, 1)))
    tm = (tm // 16) * 16                   # bf16 sublane packing is (16, 128)
    return min(tm, _round_up(M, 16))


def _pick_tile_s(S, C, Cp):
    # Largest spatial tile (multiple of 128 dividing S, or all of S) whose
    # working set stays under ~6 MiB.
    row_bytes = 12 * Cp + 8 * C            # bf16 in (x2) + f32 temps + f32 out (x2)
    limit = 6 * 1024 * 1024
    if S * row_bytes <= limit:
        return S
    best = None
    for t in range(128, S, 128):
        if S % t == 0 and t * row_bytes <= limit:
            best = t
    return best if best is not None else S


# ---------------------------------------------------------------------------
# Wrapper
# ---------------------------------------------------------------------------
def downsample_forward(x_nchw, w_oihw, gamma, beta, drop_key,
                       with_bn=True, with_drop=True, eps=1e-5):
    N, Cin, H, W = x_nchw.shape
    Cout = w_oihw.shape[0]
    Ho = (H + 2 - 3) // 2 + 1
    Wo = (W + 2 - 3) // 2 + 1
    S = Ho * Wo
    K = 9 * Cin
    M = N * S
    Kp = _round_up(K, 128)
    Cp = _round_up(Cout, 128)

    # ---- layout glue (bf16): NCHW -> NHWC, reflect pad, im2col K = 9*Cin ----
    # TODO(synk): the im2col is still materialized in HBM (now bf16, ~half the
    # old traffic); building the 9 taps in-VMEM from row bands would remove it.
    x = jnp.transpose(x_nchw, (0, 2, 3, 1)).astype(jnp.bfloat16)       # (N,H,W,Cin)
    xp = jnp.pad(x, ((0, 0), (1, 1), (1, 1), (0, 0)), mode="reflect")  # (N,H+2,W+2,Cin)
    taps = [xp[:, kh:kh + 2 * Ho:2, kw:kw + 2 * Wo:2, :]
            for kh in range(3) for kw in range(3)]
    patches = jnp.concatenate(taps, axis=-1).reshape(M, K)             # (M, 9*Cin)
    patches = jnp.pad(patches, ((0, 0), (0, Kp - K)))
    w2d = jnp.transpose(w_oihw, (2, 3, 1, 0)).astype(jnp.bfloat16).reshape(K, Cout)
    w2d = jnp.pad(w2d, ((0, Kp - K), (0, Cp - Cout)))

    tm = _pick_tile_m(M, Kp, Cp)
    M_pad = _round_up(M, tm)
    if M_pad != M:
        patches = jnp.pad(patches, ((0, M_pad - M), (0, 0)))
    n_tiles = M_pad // tm

    def _run_conv(single_buffer_weight):
        w_kwargs = {}
        if single_buffer_weight and hasattr(pl, "Buffered"):
            # Weight index_map is constant -> no need to double-buffer it (v7x VMEM).
            w_kwargs["pipeline_mode"] = pl.Buffered(1)
        return pl.pallas_call(
            conv_lrelu_stats_kernel,
            out_shape=(
                jax.ShapeDtypeStruct((M_pad, Cp), jnp.bfloat16),
                jax.ShapeDtypeStruct((n_tiles, 1, Cp), jnp.float32),
                jax.ShapeDtypeStruct((n_tiles, 1, Cp), jnp.float32),
            ),
            grid=(n_tiles,),
            in_specs=[
                pl.BlockSpec((tm, Kp), lambda i: (i, 0)),
                pl.BlockSpec((Kp, Cp), lambda i: (0, 0), **w_kwargs),
            ],
            out_specs=(
                pl.BlockSpec((tm, Cp), lambda i: (i, 0)),
                pl.BlockSpec((1, 1, Cp), lambda i: (i, 0, 0)),
                pl.BlockSpec((1, 1, Cp), lambda i: (i, 0, 0)),
            ),
            compiler_params=pltpu.CompilerParams(
                dimension_semantics=("parallel",),
                vmem_limit_bytes=32 * 1024 * 1024,
            ),
            cost_estimate=pl.CostEstimate(
                flops=2 * M_pad * Kp * Cp,
                transcendentals=0,
                bytes_accessed=(M_pad * Kp + Kp * Cp + M_pad * Cp) * 2
                + 2 * n_tiles * Cp * 4,
            ),
        )(patches, w2d)

    try:
        conv_flat, tile_sum, tile_ssq = _run_conv(True)
    except Exception:  # older Pallas without pipeline_mode / Buffered(1)
        conv_flat, tile_sum, tile_ssq = _run_conv(False)

    # ---- fold BN (training-mode batch stats) + Dropout2d into (n, c) FMA ----
    if with_bn:
        count = jnp.float32(M)
        ch_sum = jnp.sum(tile_sum, axis=(0, 1))[:Cout]
        ch_ssq = jnp.sum(tile_ssq, axis=(0, 1))[:Cout]
        mean = ch_sum / count
        var = jnp.maximum(ch_ssq / count - mean * mean, 0.0)   # guard cancellation
        inv = lax.rsqrt(var + eps)
        scale_c = gamma.reshape(-1).astype(jnp.float32) * inv
        bias_c = beta.reshape(-1).astype(jnp.float32) - mean * scale_c
    else:
        scale_c = jnp.ones((Cout,), jnp.float32)
        bias_c = jnp.zeros((Cout,), jnp.float32)
    # TODO(synk): BatchNorm running_mean/running_var momentum update not emitted.

    if with_drop:
        keep = jax.random.bernoulli(drop_key, 0.5, (N, Cout))
        mask = keep.astype(jnp.float32) / 0.5                  # Dropout2d(0.5)
    else:
        mask = jnp.ones((N, Cout), jnp.float32)

    A = jnp.pad(scale_c[None, :] * mask, ((0, 0), (0, Cp - Cout))).reshape(N, 1, Cp)
    B = jnp.pad(bias_c[None, :] * mask, ((0, 0), (0, Cp - Cout))).reshape(N, 1, Cp)

    y3 = (conv_flat if M_pad == M else conv_flat[:M]).reshape(N, S, Cp)
    tS = _pick_tile_s(S, Cout, Cp)

    out_ncs = pl.pallas_call(
        bn_drop_to_nchw_kernel,
        out_shape=jax.ShapeDtypeStruct((N, Cout, S), jnp.float32),
        grid=(N, S // tS),
        in_specs=[
            pl.BlockSpec((1, tS, Cp), lambda n, i: (n, i, 0)),
            pl.BlockSpec((1, 1, Cp), lambda n, i: (n, 0, 0)),
            pl.BlockSpec((1, 1, Cp), lambda n, i: (n, 0, 0)),
        ],
        out_specs=pl.BlockSpec((1, Cout, tS), lambda n, i: (n, 0, i)),
        compiler_params=pltpu.CompilerParams(
            dimension_semantics=("parallel", "parallel"),
            vmem_limit_bytes=32 * 1024 * 1024,
        ),
        cost_estimate=pl.CostEstimate(
            flops=2 * N * S * Cp,
            transcendentals=0,
            bytes_accessed=N * S * (Cp * 2 + Cout * 4) + 2 * N * Cp * 4,
        ),
    )(y3, A, B)

    return out_ncs.reshape(N, Cout, Ho, Wo)                    # NCHW


# ---------------------------------------------------------------------------
# Pure-JAX reference (same semantics as the PyTorch module, same dropout mask)
# ---------------------------------------------------------------------------
def _reference(x_nchw, w_oihw, gamma, beta, mask_nc,
               with_bn=True, with_drop=True, eps=1e-5):
    x = jnp.transpose(x_nchw, (0, 2, 3, 1)).astype(jnp.float32)
    xp = jnp.pad(x, ((0, 0), (1, 1), (1, 1), (0, 0)), mode="reflect")
    w = jnp.transpose(w_oihw, (2, 3, 1, 0)).astype(jnp.float32)        # HWIO
    y = lax.conv_general_dilated(xp, w, window_strides=(2, 2), padding="VALID",
                                 dimension_numbers=("NHWC", "HWIO", "NHWC"))
    y = jnp.where(y >= 0.0, y, 0.2 * y)
    if with_bn:
        mean = jnp.mean(y, axis=(0, 1, 2))
        var = jnp.mean((y - mean) ** 2, axis=(0, 1, 2))
        y = (y - mean) * lax.rsqrt(var + eps) * gamma.reshape(-1) + beta.reshape(-1)
    if with_drop:
        y = y * mask_nc[:, None, None, :]
    return jnp.transpose(y, (0, 3, 1, 2))


if __name__ == "__main__":
    key = jax.random.PRNGKey(0)
    k_x, k_w, k_drop = jax.random.split(key, 3)

    N, Cin, Cout, H, W = 2, 4, 8, 16, 16
    x = jax.random.normal(k_x, (N, Cin, H, W), jnp.float32)
    w = jax.random.normal(k_w, (Cout, Cin, 3, 3), jnp.float32) * 0.1   # conv weight, bias=False
    gamma = jnp.ones((Cout,), jnp.float32)                             # BN weight
    beta = jnp.zeros((Cout,), jnp.float32)                             # BN bias

    y = downsample_forward(x, w, gamma, beta, k_drop,
                           with_bn=True, with_drop=True)
    jax.block_until_ready(y)
    assert y.shape == (N, Cout, H // 2, W // 2), y.shape

    # Correctness vs pure-JAX reference: same dropout mask; reference uses the
    # same bf16-rounded inputs so the remaining delta is only the bf16
    # inter-kernel activation.
    keep = jax.random.bernoulli(k_drop, 0.5, (N, Cout))
    mask_nc = keep.astype(jnp.float32) / 0.5
    x_bf = x.astype(jnp.bfloat16).astype(jnp.float32)
    w_bf = w.astype(jnp.bfloat16).astype(jnp.float32)
    y_ref = _reference(x_bf, w_bf, gamma, beta, mask_nc)
    err = float(jnp.max(jnp.abs(y - y_ref)))
    assert jnp.allclose(y, y_ref, atol=0.1, rtol=0.05), err

    print("KERNEL_OK")
</pallas_src>

<mosaic_0001>
module attributes {stable_mosaic.version = 11 : i64} {
  func.func @conv_lrelu_stats_kernel(%arg0: i32, %arg1: memref<128x128xbf16, #tpu.memory_space<vmem>>, %arg2: memref<128x128xbf16, #tpu.memory_space<vmem>>, %arg3: memref<128x128xbf16, #tpu.memory_space<vmem>>, %arg4: memref<1x1x128xf32, #tpu.memory_space<vmem>>, %arg5: memref<1x1x128xf32, #tpu.memory_space<vmem>>) attributes {dimension_semantics = [#tpu.dimension_semantics<parallel>], iteration_bounds = array<i64: 1>, scalar_prefetch = 0 : i64, scratch_operands = 0 : i64, tpu.core_type = #tpu.core_type<tc>, window_params = [{transform_indices = @transform_0, window_bounds = array<i64: 128, 128>}, {pipeline_mode = #tpu.pipeline_mode<synchronous>, transform_indices = @transform_1, window_bounds = array<i64: 128, 128>}, {transform_indices = @transform_2, window_bounds = array<i64: 128, 128>}, {transform_indices = @transform_3, window_bounds = array<i64: 1, 1, 128>}, {transform_indices = @transform_4, window_bounds = array<i64: 1, 1, 128>}]} {
    %c0 = arith.constant 0 : index
    %c0_0 = arith.constant 0 : index
    %0 = vector.load %arg1[%c0, %c0_0] : memref<128x128xbf16, #tpu.memory_space<vmem>>, vector<128x128xbf16>
    %c0_1 = arith.constant 0 : index
    %c0_2 = arith.constant 0 : index
    %1 = vector.load %arg2[%c0_1, %c0_2] : memref<128x128xbf16, #tpu.memory_space<vmem>>, vector<128x128xbf16>
    %cst = arith.constant dense<0.000000e+00> : vector<128x128xf32>
    %2 = tpu.matmul %0, %1, %cst {dimension_numbers = #tpu.dot_dimension_numbers<[1], [0], [0], [1], [0, 0, 1, 1], [], []>} : vector<128x128xbf16>, vector<128x128xbf16>, vector<128x128xf32> -> vector<128x128xf32>
    %cst_3 = arith.constant 0.000000e+00 : f32
    %3 = vector.broadcast %cst_3 : f32 to vector<128x128xf32>
    %4 = arith.cmpf oge, %2, %3 : vector<128x128xf32>
    %cst_4 = arith.constant 2.000000e-01 : f32
    %5 = vector.broadcast %cst_4 : f32 to vector<128x128xf32>
    %6 = arith.mulf %5, %2 : vector<128x128xf32>
    %7 = arith.select %4, %2, %6 : vector<128x128xi1>, vector<128x128xf32>
    %8 = arith.truncf %7 : vector<128x128xf32> to vector<128x128xbf16>
    %c0_5 = arith.constant 0 : index
    %c0_6 = arith.constant 0 : index
    %9 = vector.load %arg3[%c0_5, %c0_6] : memref<128x128xbf16, #tpu.memory_space<vmem>>, vector<128x128xbf16>
    tpu.vector_store %arg3[%c0_5, %c0_6], %8 {strides = array<i32>} : memref<128x128xbf16, #tpu.memory_space<vmem>>, vector<128x128xbf16>,
    %cst_7 = arith.constant dense<0.000000e+00> : vector<128xf32>
    %10 = vector.multi_reduction <add>, %7, %cst_7 [0] : vector<128x128xf32> to vector<128xf32>
    %11 = vector.shape_cast %10 : vector<128xf32> to vector<1x128xf32>
    %12 = vector.shape_cast %11 : vector<1x128xf32> to vector<1x1x128xf32>
    %c0_8 = arith.constant 0 : index
    %c0_9 = arith.constant 0 : index
    %c0_10 = arith.constant 0 : index
    %13 = vector.load %arg4[%c0_8, %c0_9, %c0_10] : memref<1x1x128xf32, #tpu.memory_space<vmem>>, vector<1x1x128xf32>
    tpu.vector_store %arg4[%c0_8, %c0_9, %c0_10], %12 {strides = array<i32>} : memref<1x1x128xf32, #tpu.memory_space<vmem>>, vector<1x1x128xf32>,
    %14 = arith.mulf %7, %7 : vector<128x128xf32>
    %cst_11 = arith.constant dense<0.000000e+00> : vector<128xf32>
    %15 = vector.multi_reduction <add>, %14, %cst_11 [0] : vector<128x128xf32> to vector<128xf32>
    %16 = vector.shape_cast %15 : vector<128xf32> to vector<1x128xf32>
    %17 = vector.shape_cast %16 : vector<1x128xf32> to vector<1x1x128xf32>
    %c0_12 = arith.constant 0 : index
    %c0_13 = arith.constant 0 : index
    %c0_14 = arith.constant 0 : index
    %18 = vector.load %arg5[%c0_12, %c0_13, %c0_14] : memref<1x1x128xf32, #tpu.memory_space<vmem>>, vector<1x1x128xf32>
    tpu.vector_store %arg5[%c0_12, %c0_13, %c0_14], %17 {strides = array<i32>} : memref<1x1x128xf32, #tpu.memory_space<vmem>>, vector<1x1x128xf32>,
    return
  }
  func.func @transform_0(%arg0: i32) -> (i32, i32) {
    %c0_i32 = arith.constant 0 : i32
    %c0_i32_0 = arith.constant 0 : i32
    return %arg0, %c0_i32 : i32, i32
  }
  func.func @transform_1(%arg0: i32) -> (i32, i32) {
    %c0_i32 = arith.constant 0 : i32
    %c0_i32_0 = arith.constant 0 : i32
    %c0_i32_1 = arith.constant 0 : i32
    return %c0_i32, %c0_i32_0 : i32, i32
  }
  func.func @transform_2(%arg0: i32) -> (i32, i32) {
    %c0_i32 = arith.constant 0 : i32
    %c0_i32_0 = arith.constant 0 : i32
    return %arg0, %c0_i32 : i32, i32
  }
  func.func @transform_3(%arg0: i32) -> (i32, i32, i32) {
    %c0_i32 = arith.constant 0 : i32
    %c0_i32_0 = arith.constant 0 : i32
    %c0_i32_1 = arith.constant 0 : i32
    return %arg0, %c0_i32, %c0_i32_0 : i32, i32, i32
  }
  func.func @transform_4(%arg0: i32) -> (i32, i32, i32) {
    %c0_i32 = arith.constant 0 : i32
    %c0_i32_0 = arith.constant 0 : i32
    %c0_i32_1 = arith.constant 0 : i32
    return %arg0, %c0_i32, %c0_i32_0 : i32, i32, i32
  }
}

module attributes {stable_mosaic.version = 11 : i64} {
  func.func @conv_lrelu_stats_kernel(%arg0: i32, %arg1: memref<128x128xbf16, #tpu.memory_space<vmem>>, %arg2: memref<128x128xbf16, #tpu.memory_space<vmem>>, %arg3: memref<128x128xbf16, #tpu.memory_space<vmem>>, %arg4: memref<1x1x128xf32, #tpu.memory_space<vmem>>, %arg5: memref<1x1x128xf32, #tpu.memory_space<vmem>>) attributes {dimension_semantics = [#tpu.dimension_semantics<parallel>], iteration_bounds = array<i64: 1>, scalar_prefetch = 0 : i64, scratch_operands = 0 : i64, tpu.core_type = #tpu.core_type<tc>, window_params = [{transform_indices = @transform_0, window_bounds = array<i64: 128, 128>}, {pipeline_mode = #tpu.pipeline_mode<synchronous>, transform_indices = @transform_1, window_bounds = array<i64: 128, 128>}, {transform_indices = @transform_2, window_bounds = array<i64: 128, 128>}, {transform_indices = @transform_3, window_bounds = array<i64: 1, 1, 128>}, {transform_indices = @transform_4, window_bounds = array<i64: 1, 1, 128>}]} {
    %c0 = arith.constant 0 : index
    %c0_0 = arith.constant 0 : index
    %0 = vector.load %arg1[%c0, %c0_0] : memref<128x128xbf16, #tpu.memory_space<vmem>>, vector<128x128xbf16>
    %c0_1 = arith.constant 0 : index
    %c0_2 = arith.constant 0 : index
    %1 = vector.load %arg2[%c0_1, %c0_2] : memref<128x128xbf16, #tpu.memory_space<vmem>>, vector<128x128xbf16>
    %cst = arith.constant dense<0.000000e+00> : vector<128x128xf32>
    %2 = tpu.matmul %0, %1, %cst {dimension_numbers = #tpu.dot_dimension_numbers<[1], [0], [0], [1], [0, 0, 1, 1], [], []>} : vector<128x128xbf16>, vector<128x128xbf16>, vector<128x128xf32> -> vector<128x128xf32>
    %cst_3 = arith.constant 0.000000e+00 : f32
    %3 = vector.broadcast %cst_3 : f32 to vector<128x128xf32>
    %4 = arith.cmpf oge, %2, %3 : vector<128x128xf32>
    %cst_4 = arith.constant 2.000000e-01 : f32
    %5 = vector.broadcast %cst_4 : f32 to vector<128x128xf32>
    %6 = arith.mulf %5, %2 : vector<128x128xf32>
    %7 = arith.select %4, %2, %6 : vector<128x128xi1>, vector<128x128xf32>
    %8 = arith.truncf %7 : vector<128x128xf32> to vector<128x128xbf16>
    %c0_5 = arith.constant 0 : index
    %c0_6 = arith.constant 0 : index
    %9 = vector.load %arg3[%c0_5, %c0_6] : memref<128x128xbf16, #tpu.memory_space<vmem>>, vector<128x128xbf16>
    tpu.vector_store %arg3[%c0_5, %c0_6], %8 {strides = array<i32>} : memref<128x128xbf16, #tpu.memory_space<vmem>>, vector<128x128xbf16>,
    %cst_7 = arith.constant dense<0.000000e+00> : vector<128xf32>
    %10 = vector.multi_reduction <add>, %7, %cst_7 [0] : vector<128x128xf32> to vector<128xf32>
    %11 = vector.shape_cast %10 : vector<128xf32> to vector<1x128xf32>
    %12 = vector.shape_cast %11 : vector<1x128xf32> to vector<1x1x128xf32>
    %c0_8 = arith.constant 0 : index
    %c0_9 = arith.constant 0 : index
    %c0_10 = arith.constant 0 : index
    %13 = vector.load %arg4[%c0_8, %c0_9, %c0_10] : memref<1x1x128xf32, #tpu.memory_space<vmem>>, vector<1x1x128xf32>
    tpu.vector_store %arg4[%c0_8, %c0_9, %c0_10], %12 {strides = array<i32>} : memref<1x1x128xf32, #tpu.memory_space<vmem>>, vector<1x1x128xf32>,
    %14 = arith.mulf %7, %7 : vector<128x128xf32>
    %cst_11 = arith.constant dense<0.000000e+00> : vector<128xf32>
    %15 = vector.multi_reduction <add>, %14, %cst_11 [0] : vector<128x128xf32> to vector<128xf32>
    %16 = vector.shape_cast %15 : vector<128xf32> to vector<1x128xf32>
    %17 = vector.shape_cast %16 : vector<1x128xf32> to vector<1x1x128xf32>
    %c0_12 = arith.constant 0 : index
    %c0_13 = arith.constant 0 : index
    %c0_14 = arith.constant 0 : index
    %18 = vector.load %arg5[%c0_12, %c0_13, %c0_14] : memref<1x1x128xf32, #tpu.memory_space<vmem>>, vector<1x1x128xf32>
    tpu.vector_store %arg5[%c0_12, %c0_13, %c0_14], %17 {strides = array<i32>} : memref<1x1x128xf32, #tpu.memory_space<vmem>>, vector<1x1x128xf32>,
    return
  }
  func.func @transform_0(%arg0: i32) -> (i32, i32) {
    %c0_i32 = arith.constant 0 : i32
    %c0_i32_0 = arith.constant 0 : i32
    return %arg0, %c0_i32 : i32, i32
  }
  func.func @transform_1(%arg0: i32) -> (i32, i32) {
    %c0_i32 = arith.constant 0 : i32
    %c0_i32_0 = arith.constant 0 : i32
    %c0_i32_1 = arith.constant 0 : i32
    return %c0_i32, %c0_i32_0 : i32, i32
  }
  func.func @transform_2(%arg0: i32) -> (i32, i32) {
    %c0_i32 = arith.constant 0 : i32
    %c0_i32_0 = arith.constant 0 : i32
    return %arg0, %c0_i32 : i32, i32
  }
  func.func @transform_3(%arg0: i32) -> (i32, i32, i32) {
    %c0_i32 = arith.constant 0 : i32
    %c0_i32_0 = arith.constant 0 : i32
    %c0_i32_1 = arith.constant 0 : i32
    return %arg0, %c0_i32, %c0_i32_0 : i32, i32, i32
  }
  func.func @transform_4(%arg0: i32) -> (i32, i32, i32) {
    %c0_i32 = arith.constant 0 : i32
    %c0_i32_0 = arith.constant 0 : i32
    %c0_i32_1 = arith.constant 0 : i32
    return %arg0, %c0_i32, %c0_i32_0 : i32, i32, i32
  }
}

</mosaic_0001>

<llo_original>
// kernel: tpu_custom_call.1
$region0: #{tpu_custom_call.1}
  #allocation0 [shape = 'u32[]', space=smem, size = 0x4, offset = 0x4, fixed_abs, tag = 'smem constant byte address 0x4 - core index']
  #allocation1 [shape = 'u32[144,128]{1,0:T(1,128)}', space=vmem, size = 0x12000, scoped, tag = 'internal scratch']
  %s0 = inlined_call_operand.hbm [shape: bf16[128,128], index: 0, kind: input, shape index: {}]
  %s1 = inlined_call_operand.hbm [shape: bf16[128,128], index: 1, kind: input, shape index: {}]
  %s2 = inlined_call_operand.hbm [shape: bf16[128,128], index: 2, kind: output, shape index: {0}]
  %s3 = inlined_call_operand.hbm [shape: f32[1,1,128], index: 3, kind: output, shape index: {1}]
  %s4 = inlined_call_operand.hbm [shape: f32[1,1,128], index: 4, kind: output, shape index: {2}]
  %5 = xla_tuple %s2, %s3, %s4
  %s6 = sld [smem:[#allocation0]]
  $region42: #{tpu_custom_call.1} parent=0
    _
  %s8 = ssub.s32 1, %s6
  %s9 = scalar_select 0, %s8, %s6
  $region1: #{tpu_custom_call.1} parent=0
    #allocation2 [shape = 'u8[32768]{0}', space=vmem, size = 0x8000, scoped, tag = 'input window, operand 0, single buffered']
    #allocation3 [shape = 's32[1]{0}', space=sflag, size = 0x4, scoped, tag = 'scoped memory for tpu_custom_call.1']
    #allocation4 [shape = 's32[1]{0}', space=sflag, size = 0x4, scoped, tag = 'scoped memory for tpu_custom_call.1']
    #allocation5 [shape = 'u8[32768]{0}', space=vmem, size = 0x8000, scoped, tag = 'input window, operand 1, single buffered']
    #allocation6 [shape = 's32[1]{0}', space=sflag, size = 0x4, scoped, tag = 'scoped memory for tpu_custom_call.1']
    #allocation7 [shape = 'u8[32768]{0}', space=vmem, size = 0x8000, scoped, tag = 'output window, operand 0, single buffered']
    #allocation8 [shape = 'u8[512]{0}', space=vmem, size = 0x400, scoped, tag = 'output window, operand 1, single buffered']
    #allocation9 [shape = 's32[1]{0}', space=sflag, size = 0x4, scoped, tag = 'scoped memory for tpu_custom_call.1']
    #allocation10 [shape = 'u8[512]{0}', space=vmem, size = 0x400, scoped, tag = 'output window, operand 2, single buffered']
    %10 = vsyncpa [#allocation3], 0
    %11 = vsyncpa [#allocation6], 0
    %12 = vsyncpa [#allocation4], 0
    %13 = vsyncpa [#allocation9], 0
    // Predicated region
    $region2: #{tpu_custom_call.1} parent=1 // pred_check
      _
    $region3: #{tpu_custom_call.1} parent=1 // pred_check_branch
      %15 = sbr.rel (0) target = $region5
    $region4: #{tpu_custom_call.1} parent=1 // pred_region
      %s17 = ssub.s32 1024, 1024
      %18 = vsyncadd [#allocation3], %s17
      %s19 = sshll.u32 [#allocation2], 4
      %s20 = int_to_ptr.vmem [resolvable:$true] %s19
      %25 = dma.hbm_to_vmem [thread:$0]  %s0, 1024, %s20, [#allocation3], 64, 64, 4
    $region5: #{tpu_custom_call.1} parent=1 // pred_fallthru
      _
    // Predicated region
    $region6: #{tpu_custom_call.1} parent=1 // pred_check
      _
    $region7: #{tpu_custom_call.1} parent=1 // pred_check_branch
      %27 = sbr.rel (0) target = $region9
    $region8: #{tpu_custom_call.1} parent=1 // pred_region
      %s29 = ssub.s32 1024, 1024
      %30 = vsyncadd [#allocation6], %s29
      %s31 = sshll.u32 [#allocation5], 4
      %s32 = int_to_ptr.vmem [resolvable:$true] %s31
      %37 = dma.hbm_to_vmem [thread:$0]  %s1, 1024, %s32, [#allocation6], 64, 64, 4
    $region9: #{tpu_custom_call.1} parent=1 // pred_fallthru
      _
    // Predicated region
    $region10: #{tpu_custom_call.1} parent=1 // pred_check
      _
    $region11: #{tpu_custom_call.1} parent=1 // pred_check_branch
      %39 = sbr.rel (0) target = $region13
    $region12: #{tpu_custom_call.1} parent=1 // pred_region
      %40 = dma.done [#allocation3], 1024
    $region13: #{tpu_custom_call.1} parent=1 // pred_fallthru
      _
    // Predicated region
    $region14: #{tpu_custom_call.1} parent=1 // pred_check
      _
    $region15: #{tpu_custom_call.1} parent=1 // pred_check_branch
      %42 = sbr.rel (0) target = $region17
    $region16: #{tpu_custom_call.1} parent=1 // pred_region
      %43 = dma.done [#allocation6], 1024
    $region17: #{tpu_custom_call.1} parent=1 // pred_fallthru
      _
    %v45 = vld [vmem:[#allocation2] sm:$0xf]
    %v46 = vld [vmem:[#allocation2 + $0x4] sm:$0xf]
    %v47 = vld [vmem:[#allocation2 + $0x8] sm:$0xf]
    %v48 = vld [vmem:[#allocation2 + $0xc] sm:$0xf]
    %v49 = vld [vmem:[#allocation2 + $0x10] sm:$0xf]
    %v50 = vld [vmem:[#allocation2 + $0x14] sm:$0xf]
    %v51 = vld [vmem:[#allocation2 + $0x18] sm:$0xf]
    %v52 = vld [vmem:[#allocation2 + $0x1c] sm:$0xf]
    %v53 = vld [vmem:[#allocation2 + $0x20] sm:$0xf]
    %v54 = vld [vmem:[#allocation2 + $0x24] sm:$0xf]
    %v55 = vld [vmem:[#allocation2 + $0x28] sm:$0xf]
    %v56 = vld [vmem:[#allocation2 + $0x2c] sm:$0xf]
    %v57 = vld [vmem:[#allocation2 + $0x30] sm:$0xf]
    %v58 = vld [vmem:[#allocation2 + $0x34] sm:$0xf]
    %v59 = vld [vmem:[#allocation2 + $0x38] sm:$0xf]
    %v60 = vld [vmem:[#allocation2 + $0x3c] sm:$0xf]
    %v61 = vld [vmem:[#allocation5] sm:$0xf]
    %v62 = vld [vmem:[#allocation5 + $0x4] sm:$0xf]
    %v63 = vld [vmem:[#allocation5 + $0x8] sm:$0xf]
    %v64 = vld [vmem:[#allocation5 + $0xc] sm:$0xf]
    %v65 = vld [vmem:[#allocation5 + $0x10] sm:$0xf]
    %v66 = vld [vmem:[#allocation5 + $0x14] sm:$0xf]
    %v67 = vld [vmem:[#allocation5 + $0x18] sm:$0xf]
    %v68 = vld [vmem:[#allocation5 + $0x1c] sm:$0xf]
    %v69 = vld [vmem:[#allocation5 + $0x20] sm:$0xf]
    %v70 = vld [vmem:[#allocation5 + $0x24] sm:$0xf]
    %v71 = vld [vmem:[#allocation5 + $0x28] sm:$0xf]
    %v72 = vld [vmem:[#allocation5 + $0x2c] sm:$0xf]
    %v73 = vld [vmem:[#allocation5 + $0x30] sm:$0xf]
    %v74 = vld [vmem:[#allocation5 + $0x34] sm:$0xf]
    %v75 = vld [vmem:[#allocation5 + $0x38] sm:$0xf]
    %v76 = vld [vmem:[#allocation5 + $0x3c] sm:$0xf]
    %v93 = vunpack.c.l.b16 %v45
    %v94 = vunpack.c.l.b16 %v46
    %v95 = vunpack.c.l.b16 %v47
    %v96 = vunpack.c.l.b16 %v48
    %v97 = vunpack.c.l.b16 %v49
    %v98 = vunpack.c.l.b16 %v50
    %v99 = vunpack.c.l.b16 %v51
    %v100 = vunpack.c.l.b16 %v52
    %v101 = vunpack.c.l.b16 %v53
    %v102 = vunpack.c.l.b16 %v54
    %v103 = vunpack.c.l.b16 %v55
    %v104 = vunpack.c.l.b16 %v56
    %v105 = vunpack.c.l.b16 %v57
    %v106 = vunpack.c.l.b16 %v58
    %v107 = vunpack.c.l.b16 %v59
    %v108 = vunpack.c.l.b16 %v60
    %v109 = vpack.c.b16 %v94, %v93
    %v110 = vpack.c.b16 %v96, %v95
    %v111 = vpack.c.b16 %v98, %v97
    %v112 = vpack.c.b16 %v100, %v99
    %v113 = vpack.c.b16 %v102, %v101
    %v114 = vpack.c.b16 %v104, %v103
    %v115 = vpack.c.b16 %v106, %v105
    %v116 = vpack.c.b16 %v108, %v107
    %v141 = vunpack.c.l.b16 %v61
    %v142 = vunpack.c.l.b16 %v62
    %v143 = vunpack.c.l.b16 %v63
    %v144 = vunpack.c.l.b16 %v64
    %v145 = vunpack.c.l.b16 %v65
    %v146 = vunpack.c.l.b16 %v66
    %v147 = vunpack.c.l.b16 %v67
    %v148 = vunpack.c.l.b16 %v68
    %v149 = vunpack.c.l.b16 %v69
    %v150 = vunpack.c.l.b16 %v70
    %v151 = vunpack.c.l.b16 %v71
    %v152 = vunpack.c.l.b16 %v72
    %v153 = vunpack.c.l.b16 %v73
    %v154 = vunpack.c.l.b16 %v74
    %v155 = vunpack.c.l.b16 %v75
    %v156 = vunpack.c.l.b16 %v76
    %v157 = vpack.c.b16 %v142, %v141
    %v158 = vpack.c.b16 %v144, %v143
    %v159 = vpack.c.b16 %v146, %v145
    %v160 = vpack.c.b16 %v148, %v147
    %v161 = vpack.c.b16 %v150, %v149
    %v162 = vpack.c.b16 %v152, %v151
    %v163 = vpack.c.b16 %v154, %v153
    %v164 = vpack.c.b16 %v156, %v155
    %173 = vmatprep.subr.bf16.mxu0 0
    %174 = vmatpush1.bf16.msra.mxu0 %v157
    %175 = vmatprep.subr.bf16.mxu0 0
    %176 = vmatpush1.bf16.msra.mxu0 %v158
    %177 = vmatprep.subr.bf16.mxu0 0
    %178 = vmatpush1.bf16.msra.mxu0 %v159
    %179 = vmatprep.subr.bf16.mxu0 0
    %180 = vmatpush1.bf16.msra.mxu0 %v160
    %181 = vmatprep.subr.bf16.mxu0 0
    %182 = vmatpush1.bf16.msra.mxu0 %v161
    %183 = vmatprep.subr.bf16.mxu0 0
    %184 = vmatpush1.bf16.msra.mxu0 %v162
    %185 = vmatprep.subr.bf16.mxu0 0
    %186 = vmatpush1.bf16.msra.mxu0 %v163
    %187 = vmatprep.subr.bf16.mxu0 0
    %188 = vmatpush1.bf16.msra.mxu0 %v164
    %189 = vmatprep.subr.bf16.mxu0 0
    %190 = vmatpush1.bf16.msra.mxu0 0
    %191 = vmatprep.subr.bf16.mxu0 0
    %192 = vmatpush1.bf16.msra.mxu0 0
    %193 = vmatprep.subr.bf16.mxu0 0
    %194 = vmatpush1.bf16.msra.mxu0 0
    %195 = vmatprep.subr.bf16.mxu0 0
    %196 = vmatpush1.bf16.msra.mxu0 0
    %197 = vmatprep.subr.bf16.mxu0 0
    %198 = vmatpush1.bf16.msra.mxu0 0
    %199 = vmatprep.subr.bf16.mxu0 0
    %200 = vmatpush1.bf16.msra.mxu0 0
    %201 = vmatprep.subr.bf16.mxu0 0
    %202 = vmatpush1.bf16.msra.mxu0 0
    %203 = vmatprep.subr.bf16.mxu0 0
    %204 = vmatpush1.bf16.msra.mxu0 0
    %205 = vmatprep.mubr.bf16.mxu0 0
    %206 = vmatmul.mubr.bf16.gmra.mrb[0].mxu0 %v109
    %v207 = vpop.f32.mrb[0].mxu0
    %v208 = vadd.f32 0.0, %v207
    %v209 = vpop.f32.mrb[0].mxu0
    %v210 = vpop.f32.mrb[0].mxu0
    %v211 = vadd.f32 0.0, %v210
    %v212 = vpop.f32.mrb[0].mxu0
    %213 = vmatprep.mubr.bf16.mxu0 0
    %214 = vmatmul.mubr.bf16.gmra.mrb[0].mxu0 %v110
    %v215 = vpop.f32.mrb[0].mxu0
    %v216 = vadd.f32 0.0, %v215
    %v217 = vpop.f32.mrb[0].mxu0
    %v218 = vpop.f32.mrb[0].mxu0
    %v219 = vadd.f32 0.0, %v218
    %v220 = vpop.f32.mrb[0].mxu0
    %221 = vmatprep.mubr.bf16.mxu0 0
    %222 = vmatmul.mubr.bf16.gmra.mrb[0].mxu0 %v111
    %v223 = vpop.f32.mrb[0].mxu0
    %v224 = vadd.f32 0.0, %v223
    %v225 = vpop.f32.mrb[0].mxu0
    %v226 = vpop.f32.mrb[0].mxu0
    %v227 = vadd.f32 0.0, %v226
    %v228 = vpop.f32.mrb[0].mxu0
    %229 = vmatprep.mubr.bf16.mxu0 0
    %230 = vmatmul.mubr.bf16.gmra.mrb[0].mxu0 %v112
    %v231 = vpop.f32.mrb[0].mxu0
    %v232 = vadd.f32 0.0, %v231
    %v233 = vpop.f32.mrb[0].mxu0
    %v234 = vpop.f32.mrb[0].mxu0
    %v235 = vadd.f32 0.0, %v234
    %v236 = vpop.f32.mrb[0].mxu0
    %237 = vmatprep.mubr.bf16.mxu0 0
    %238 = vmatmul.mubr.bf16.gmra.mrb[0].mxu0 %v113
    %v239 = vpop.f32.mrb[0].mxu0
    %v240 = vadd.f32 0.0, %v239
    %v241 = vpop.f32.mrb[0].mxu0
    %v242 = vpop.f32.mrb[0].mxu0
    %v243 = vadd.f32 0.0, %v242
    %v244 = vpop.f32.mrb[0].mxu0
    %245 = vmatprep.mubr.bf16.mxu0 0
    %246 = vmatmul.mubr.bf16.gmra.mrb[0].mxu0 %v114
    %v247 = vpop.f32.mrb[0].mxu0
    %v248 = vadd.f32 0.0, %v247
    %v249 = vpop.f32.mrb[0].mxu0
    %v250 = vpop.f32.mrb[0].mxu0
    %v251 = vadd.f32 0.0, %v250
    %v252 = vpop.f32.mrb[0].mxu0
    %253 = vmatprep.mubr.bf16.mxu0 0
    %254 = vmatmul.mubr.bf16.gmra.mrb[0].mxu0 %v115
    %v255 = vpop.f32.mrb[0].mxu0
    %v256 = vadd.f32 0.0, %v255
    %v257 = vpop.f32.mrb[0].mxu0
    %v258 = vpop.f32.mrb[0].mxu0
    %v259 = vadd.f32 0.0, %v258
    %v260 = vpop.f32.mrb[0].mxu0
    %261 = vmatprep.mubr.bf16.mxu0 0
    %262 = vmatmul.mubr.bf16.gmra.mrb[0].mxu0 %v116
    %v263 = vpop.f32.mrb[0].mxu0
    %v264 = vadd.f32 0.0, %v263
    %v265 = vpop.f32.mrb[0].mxu0
    %v266 = vpop.f32.mrb[0].mxu0
    %v267 = vadd.f32 0.0, %v266
    %v268 = vpop.f32.mrb[0].mxu0
    %269 = vdwg.mxu0
    %vm270 = vcmp.ge.f32.partialorder %v208, 0.0
    %vm271 = vcmp.ge.f32.partialorder %v211, 0.0
    %vm272 = vcmp.ge.f32.partialorder %v216, 0.0
    %vm273 = vcmp.ge.f32.partialorder %v219, 0.0
    %vm274 = vcmp.ge.f32.partialorder %v224, 0.0
    %vm275 = vcmp.ge.f32.partialorder %v227, 0.0
    %vm276 = vcmp.ge.f32.partialorder %v232, 0.0
    %vm277 = vcmp.ge.f32.partialorder %v235, 0.0
    %vm278 = vcmp.ge.f32.partialorder %v240, 0.0
    %vm279 = vcmp.ge.f32.partialorder %v243, 0.0
    %vm280 = vcmp.ge.f32.partialorder %v248, 0.0
    %vm281 = vcmp.ge.f32.partialorder %v251, 0.0
    %vm282 = vcmp.ge.f32.partialorder %v256, 0.0
    %vm283 = vcmp.ge.f32.partialorder %v259, 0.0
    %vm284 = vcmp.ge.f32.partialorder %v264, 0.0
    %vm285 = vcmp.ge.f32.partialorder %v267, 0.0
    %v286 = vmul.f32 %v208, 0.2
    %v287 = vmul.f32 %v211, 0.2
    %v288 = vmul.f32 %v216, 0.2
    %v289 = vmul.f32 %v219, 0.2
    %v290 = vmul.f32 %v224, 0.2
    %v291 = vmul.f32 %v227, 0.2
    %v292 = vmul.f32 %v232, 0.2
    %v293 = vmul.f32 %v235, 0.2
    %v294 = vmul.f32 %v240, 0.2
    %v295 = vmul.f32 %v243, 0.2
    %v296 = vmul.f32 %v248, 0.2
    %v297 = vmul.f32 %v251, 0.2
    %v298 = vmul.f32 %v256, 0.2
    %v299 = vmul.f32 %v259, 0.2
    %v300 = vmul.f32 %v264, 0.2
    %v301 = vmul.f32 %v267, 0.2
    %v302 = vsel %vm270, %v208, %v286
    %v303 = vsel %vm271, %v211, %v287
    %v304 = vsel %vm272, %v216, %v288
    %v305 = vsel %vm273, %v219, %v289
    %v306 = vsel %vm274, %v224, %v290
    %v307 = vsel %vm275, %v227, %v291
    %v308 = vsel %vm276, %v232, %v292
    %v309 = vsel %vm277, %v235, %v293
    %v310 = vsel %vm278, %v240, %v294
    %v311 = vsel %vm279, %v243, %v295
    %v312 = vsel %vm280, %v248, %v296
    %v313 = vsel %vm281, %v251, %v297
    %v314 = vsel %vm282, %v256, %v298
    %v315 = vsel %vm283, %v259, %v299
    %v316 = vsel %vm284, %v264, %v300
    %v317 = vsel %vm285, %v267, %v301
    %v318 = vpack.c.bf16 %v303, %v302
    %v319 = vpack.c.bf16 %v305, %v304
    %v320 = vpack.c.bf16 %v307, %v306
    %v321 = vpack.c.bf16 %v309, %v308
    %v322 = vpack.c.bf16 %v311, %v310
    %v323 = vpack.c.bf16 %v313, %v312
    %v324 = vpack.c.bf16 %v315, %v314
    %v325 = vpack.c.bf16 %v317, %v316
    %v334 = vunpack.c.l.b16 %v318
    %v335 = vunpack.c.h.b16 %v318
    %v336 = vunpack.c.l.b16 %v319
    %v337 = vunpack.c.h.b16 %v319
    %v338 = vunpack.c.l.b16 %v320
    %v339 = vunpack.c.h.b16 %v320
    %v340 = vunpack.c.l.b16 %v321
    %v341 = vunpack.c.h.b16 %v321
    %v342 = vunpack.c.l.b16 %v322
    %v343 = vunpack.c.h.b16 %v322
    %v344 = vunpack.c.l.b16 %v323
    %v345 = vunpack.c.h.b16 %v323
    %v346 = vunpack.c.l.b16 %v324
    %v347 = vunpack.c.h.b16 %v324
    %v348 = vunpack.c.l.b16 %v325
    %v349 = vunpack.c.h.b16 %v325
    %v350 = vpack.c.b16 %v334, %v334
    %v351 = vpack.c.b16 %v335, %v335
    %v352 = vpack.c.b16 %v336, %v336
    %v353 = vpack.c.b16 %v337, %v337
    %v354 = vpack.c.b16 %v338, %v338
    %v355 = vpack.c.b16 %v339, %v339
    %v356 = vpack.c.b16 %v340, %v340
    %v357 = vpack.c.b16 %v341, %v341
    %v358 = vpack.c.b16 %v342, %v342
    %v359 = vpack.c.b16 %v343, %v343
    %v360 = vpack.c.b16 %v344, %v344
    %v361 = vpack.c.b16 %v345, %v345
    %v362 = vpack.c.b16 %v346, %v346
    %v363 = vpack.c.b16 %v347, %v347
    %v364 = vpack.c.b16 %v348, %v348
    %v365 = vpack.c.b16 %v349, %v349
    %382 = vst [vmem:[#allocation7] sm:$0xf] %v350
    %383 = vst [vmem:[#allocation7 + $0x4] sm:$0xf] %v351
    %384 = vst [vmem:[#allocation7 + $0x8] sm:$0xf] %v352
    %385 = vst [vmem:[#allocation7 + $0xc] sm:$0xf] %v353
    %386 = vst [vmem:[#allocation7 + $0x10] sm:$0xf] %v354
    %387 = vst [vmem:[#allocation7 + $0x14] sm:$0xf] %v355
    %388 = vst [vmem:[#allocation7 + $0x18] sm:$0xf] %v356
    %389 = vst [vmem:[#allocation7 + $0x1c] sm:$0xf] %v357
    %390 = vst [vmem:[#allocation7 + $0x20] sm:$0xf] %v358
    %391 = vst [vmem:[#allocation7 + $0x24] sm:$0xf] %v359
    %392 = vst [vmem:[#allocation7 + $0x28] sm:$0xf] %v360
    %393 = vst [vmem:[#allocation7 + $0x2c] sm:$0xf] %v361
    %394 = vst [vmem:[#allocation7 + $0x30] sm:$0xf] %v362
    %395 = vst [vmem:[#allocation7 + $0x34] sm:$0xf] %v363
    %396 = vst [vmem:[#allocation7 + $0x38] sm:$0xf] %v364
    %397 = vst [vmem:[#allocation7 + $0x3c] sm:$0xf] %v365
    %v398 = vadd.f32 %v302, %v303
    %v399 = vadd.f32 %v398, %v304
    %v400 = vadd.f32 %v399, %v305
    %v401 = vadd.f32 %v400, %v306
    %v402 = vadd.f32 %v401, %v307
    %v403 = vadd.f32 %v402, %v308
    %v404 = vadd.f32 %v403, %v309
    %v405 = vadd.f32 %v404, %v310
    %v406 = vadd.f32 %v405, %v311
    %v407 = vadd.f32 %v406, %v312
    %v408 = vadd.f32 %v407, %v313
    %v409 = vadd.f32 %v408, %v314
    %v410 = vadd.f32 %v409, %v315
    %v411 = vadd.f32 %v410, %v316
    %v412 = vadd.f32 %v411, %v317
    %v413 = vrot.slane %v412, 4
    %v414 = vadd.f32 %v412, %v413
    %v415 = vrot.slane %v414, 2
    %v416 = vadd.f32 %v414, %v415
    %v417 = vrot.slane %v416, 1
    %v418 = vadd.f32 %v416, %v417
    %419 = vst [vmem:[#allocation8] sm:$0x1] %v418
    %v420 = vmul.f32 %v302, %v302
    %v421 = vmul.f32 %v303, %v303
    %v422 = vmul.f32 %v304, %v304
    %v423 = vmul.f32 %v305, %v305
    %v424 = vmul.f32 %v306, %v306
    %v425 = vmul.f32 %v307, %v307
    %v426 = vmul.f32 %v308, %v308
    %v427 = vmul.f32 %v309, %v309
    %v428 = vmul.f32 %v310, %v310
    %v429 = vmul.f32 %v311, %v311
    %v430 = vmul.f32 %v312, %v312
    %v431 = vmul.f32 %v313, %v313
    %v432 = vmul.f32 %v314, %v314
    %v433 = vmul.f32 %v315, %v315
    %v434 = vmul.f32 %v316, %v316
    %v435 = vmul.f32 %v317, %v317
    %v436 = vadd.f32 %v420, %v421
    %v437 = vadd.f32 %v436, %v422
    %v438 = vadd.f32 %v437, %v423
    %v439 = vadd.f32 %v438, %v424
    %v440 = vadd.f32 %v439, %v425
    %v441 = vadd.f32 %v440, %v426
    %v442 = vadd.f32 %v441, %v427
    %v443 = vadd.f32 %v442, %v428
    %v444 = vadd.f32 %v443, %v429
    %v445 = vadd.f32 %v444, %v430
    %v446 = vadd.f32 %v445, %v431
    %v447 = vadd.f32 %v446, %v432
    %v448 = vadd.f32 %v447, %v433
    %v449 = vadd.f32 %v448, %v434
    %v450 = vadd.f32 %v449, %v435
    %v451 = vrot.slane %v450, 4
    %v452 = vadd.f32 %v450, %v451
    %v453 = vrot.slane %v452, 2
    %v454 = vadd.f32 %v452, %v453
    %v455 = vrot.slane %v454, 1
    %v456 = vadd.f32 %v454, %v455
    %457 = vst [vmem:[#allocation10] sm:$0x1] %v456
    // Predicated region
    $region18: #{tpu_custom_call.1} parent=1 // pred_check
      _
    $region19: #{tpu_custom_call.1} parent=1 // pred_check_branch
      %459 = sbr.rel (0) target = $region21
    $region20: #{tpu_custom_call.1} parent=1 // pred_region
      %s461 = ssub.s32 1024, 1024
      %462 = vsyncadd [#allocation4], %s461
      %s463 = sshll.u32 [#allocation7], 4
      %s464 = int_to_ptr.vmem [resolvable:$true] %s463
      %469 = dma.vmem_to_hbm [thread:$0]  %s464, 1024, %s2, [#allocation4], 64, 64, 4
    $region21: #{tpu_custom_call.1} parent=1 // pred_fallthru
      _
    // Predicated region
    $region22: #{tpu_custom_call.1} parent=1 // pred_check
      _
    $region23: #{tpu_custom_call.1} parent=1 // pred_check_branch
      %471 = sbr.rel (0) target = $region25
    $region24: #{tpu_custom_call.1} parent=1 // pred_region
      %s473 = ssub.s32 16, 16
      %474 = vsyncadd [#allocation9], %s473
      %s476 = sshll.u32 [#allocation8], 4
      %s477 = int_to_ptr.vmem [resolvable:$true] %s476
      %479 = dma.vmem_to_hbm [thread:$0]  %s477, 16, %s3, [#allocation9]
    $region25: #{tpu_custom_call.1} parent=1 // pred_fallthru
      _
    // Predicated region
    $region26: #{tpu_custom_call.1} parent=1 // pred_check
      _
    $region27: #{tpu_custom_call.1} parent=1 // pred_check_branch
      %481 = sbr.rel (0) target = $region29
    $region28: #{tpu_custom_call.1} parent=1 // pred_region
      %s483 = ssub.s32 16, 16
      %484 = vsyncadd [#allocation9], %s483
      %s486 = sshll.u32 [#allocation10], 4
      %s487 = int_to_ptr.vmem [resolvable:$true] %s486
      %489 = dma.vmem_to_hbm [thread:$0]  %s487, 16, %s4, [#allocation9]
    $region29: #{tpu_custom_call.1} parent=1 // pred_fallthru
      _
    // Predicated region
    $region30: #{tpu_custom_call.1} parent=1 // pred_check
      _
    $region31: #{tpu_custom_call.1} parent=1 // pred_check_branch
      %491 = sbr.rel (0) target = $region33
    $region32: #{tpu_custom_call.1} parent=1 // pred_region
      %492 = dma.done [#allocation4], 1024
    $region33: #{tpu_custom_call.1} parent=1 // pred_fallthru
      _
    // Predicated region
    $region34: #{tpu_custom_call.1} parent=1 // pred_check
      _
    $region35: #{tpu_custom_call.1} parent=1 // pred_check_branch
      %494 = sbr.rel (0) target = $region37
    $region36: #{tpu_custom_call.1} parent=1 // pred_region
      %495 = dma.done [#allocation9], 16
    $region37: #{tpu_custom_call.1} parent=1 // pred_fallthru
      _
    // Predicated region
    $region38: #{tpu_custom_call.1} parent=1 // pred_check
      _
    $region39: #{tpu_custom_call.1} parent=1 // pred_check_branch
      %497 = sbr.rel (0) target = $region41
    $region40: #{tpu_custom_call.1} parent=1 // pred_region
      %498 = dma.done [#allocation9], 16
    $region41: #{tpu_custom_call.1} parent=1 // pred_fallthru
      _
    %499 = vsyncpa [#allocation3], 1
    %500 = vsyncpa [#allocation6], 1
    %501 = vsyncpa [#allocation4], 1
    %502 = vsyncpa [#allocation9], 1

// kernel: tpu_custom_call.1
$region0: #{tpu_custom_call.1}
  #allocation0 [shape = 'u32[]', space=smem, size = 0x4, offset = 0x4, fixed_abs, tag = 'smem constant byte address 0x4 - core index']
  #allocation1 [shape = 'u32[144,128]{1,0:T(1,128)}', space=vmem, size = 0x12000, scoped, tag = 'internal scratch']
  %s0 = inlined_call_operand.hbm [shape: bf16[128,128], index: 0, kind: input, shape index: {}]
  %s1 = inlined_call_operand.hbm [shape: bf16[128,128], index: 1, kind: input, shape index: {}]
  %s2 = inlined_call_operand.hbm [shape: bf16[128,128], index: 2, kind: output, shape index: {0}]
  %s3 = inlined_call_operand.hbm [shape: f32[1,1,128], index: 3, kind: output, shape index: {1}]
  %s4 = inlined_call_operand.hbm [shape: f32[1,1,128], index: 4, kind: output, shape index: {2}]
  %5 = xla_tuple %s2, %s3, %s4
  %s6 = sld [smem:[#allocation0]]
  $region42: #{tpu_custom_call.1} parent=0
    _
  %s8 = ssub.s32 1, %s6
  %s9 = scalar_select 0, %s8, %s6
  $region1: #{tpu_custom_call.1} parent=0
    #allocation2 [shape = 'u8[32768]{0}', space=vmem, size = 0x8000, scoped, tag = 'input window, operand 0, single buffered']
    #allocation3 [shape = 's32[1]{0}', space=sflag, size = 0x4, scoped, tag = 'scoped memory for tpu_custom_call.1']
    #allocation4 [shape = 's32[1]{0}', space=sflag, size = 0x4, scoped, tag = 'scoped memory for tpu_custom_call.1']
    #allocation5 [shape = 'u8[32768]{0}', space=vmem, size = 0x8000, scoped, tag = 'input window, operand 1, single buffered']
    #allocation6 [shape = 's32[1]{0}', space=sflag, size = 0x4, scoped, tag = 'scoped memory for tpu_custom_call.1']
    #allocation7 [shape = 'u8[32768]{0}', space=vmem, size = 0x8000, scoped, tag = 'output window, operand 0, single buffered']
    #allocation8 [shape = 'u8[512]{0}', space=vmem, size = 0x400, scoped, tag = 'output window, operand 1, single buffered']
    #allocation9 [shape = 's32[1]{0}', space=sflag, size = 0x4, scoped, tag = 'scoped memory for tpu_custom_call.1']
    #allocation10 [shape = 'u8[512]{0}', space=vmem, size = 0x400, scoped, tag = 'output window, operand 2, single buffered']
    %10 = vsyncpa [#allocation3], 0
    %11 = vsyncpa [#allocation6], 0
    %12 = vsyncpa [#allocation4], 0
    %13 = vsyncpa [#allocation9], 0
    // Predicated region
    $region2: #{tpu_custom_call.1} parent=1 // pred_check
      _
    $region3: #{tpu_custom_call.1} parent=1 // pred_check_branch
      %15 = sbr.rel (0) target = $region5
    $region4: #{tpu_custom_call.1} parent=1 // pred_region
      %s17 = ssub.s32 1024, 1024
      %18 = vsyncadd [#allocation3], %s17
      %s19 = sshll.u32 [#allocation2], 4
      %s20 = int_to_ptr.vmem [resolvable:$true] %s19
      %25 = dma.hbm_to_vmem [thread:$0]  %s0, 1024, %s20, [#allocation3], 64, 64, 4
    $region5: #{tpu_custom_call.1} parent=1 // pred_fallthru
      _
    // Predicated region
    $region6: #{tpu_custom_call.1} parent=1 // pred_check
      _
    $region7: #{tpu_custom_call.1} parent=1 // pred_check_branch
      %27 = sbr.rel (0) target = $region9
    $region8: #{tpu_custom_call.1} parent=1 // pred_region
      %s29 = ssub.s32 1024, 1024
      %30 = vsyncadd [#allocation6], %s29
      %s31 = sshll.u32 [#allocation5], 4
      %s32 = int_to_ptr.vmem [resolvable:$true] %s31
      %37 = dma.hbm_to_vmem [thread:$0]  %s1, 1024, %s32, [#allocation6], 64, 64, 4
    $region9: #{tpu_custom_call.1} parent=1 // pred_fallthru
      _
    // Predicated region
    $region10: #{tpu_custom_call.1} parent=1 // pred_check
      _
    $region11: #{tpu_custom_call.1} parent=1 // pred_check_branch
      %39 = sbr.rel (0) target = $region13
    $region12: #{tpu_custom_call.1} parent=1 // pred_region
      %40 = dma.done [#allocation3], 1024
    $region13: #{tpu_custom_call.1} parent=1 // pred_fallthru
      _
    // Predicated region
    $region14: #{tpu_custom_call.1} parent=1 // pred_check
      _
    $region15: #{tpu_custom_call.1} parent=1 // pred_check_branch
      %42 = sbr.rel (0) target = $region17
    $region16: #{tpu_custom_call.1} parent=1 // pred_region
      %43 = dma.done [#allocation6], 1024
    $region17: #{tpu_custom_call.1} parent=1 // pred_fallthru
      _
    %v45 = vld [vmem:[#allocation2] sm:$0xf]
    %v46 = vld [vmem:[#allocation2 + $0x4] sm:$0xf]
    %v47 = vld [vmem:[#allocation2 + $0x8] sm:$0xf]
    %v48 = vld [vmem:[#allocation2 + $0xc] sm:$0xf]
    %v49 = vld [vmem:[#allocation2 + $0x10] sm:$0xf]
    %v50 = vld [vmem:[#allocation2 + $0x14] sm:$0xf]
    %v51 = vld [vmem:[#allocation2 + $0x18] sm:$0xf]
    %v52 = vld [vmem:[#allocation2 + $0x1c] sm:$0xf]
    %v53 = vld [vmem:[#allocation2 + $0x20] sm:$0xf]
    %v54 = vld [vmem:[#allocation2 + $0x24] sm:$0xf]
    %v55 = vld [vmem:[#allocation2 + $0x28] sm:$0xf]
    %v56 = vld [vmem:[#allocation2 + $0x2c] sm:$0xf]
    %v57 = vld [vmem:[#allocation2 + $0x30] sm:$0xf]
    %v58 = vld [vmem:[#allocation2 + $0x34] sm:$0xf]
    %v59 = vld [vmem:[#allocation2 + $0x38] sm:$0xf]
    %v60 = vld [vmem:[#allocation2 + $0x3c] sm:$0xf]
    %v61 = vld [vmem:[#allocation5] sm:$0xf]
    %v62 = vld [vmem:[#allocation5 + $0x4] sm:$0xf]
    %v63 = vld [vmem:[#allocation5 + $0x8] sm:$0xf]
    %v64 = vld [vmem:[#allocation5 + $0xc] sm:$0xf]
    %v65 = vld [vmem:[#allocation5 + $0x10] sm:$0xf]
    %v66 = vld [vmem:[#allocation5 + $0x14] sm:$0xf]
    %v67 = vld [vmem:[#allocation5 + $0x18] sm:$0xf]
    %v68 = vld [vmem:[#allocation5 + $0x1c] sm:$0xf]
    %v69 = vld [vmem:[#allocation5 + $0x20] sm:$0xf]
    %v70 = vld [vmem:[#allocation5 + $0x24] sm:$0xf]
    %v71 = vld [vmem:[#allocation5 + $0x28] sm:$0xf]
    %v72 = vld [vmem:[#allocation5 + $0x2c] sm:$0xf]
    %v73 = vld [vmem:[#allocation5 + $0x30] sm:$0xf]
    %v74 = vld [vmem:[#allocation5 + $0x34] sm:$0xf]
    %v75 = vld [vmem:[#allocation5 + $0x38] sm:$0xf]
    %v76 = vld [vmem:[#allocation5 + $0x3c] sm:$0xf]
    %v93 = vunpack.c.l.b16 %v45
    %v94 = vunpack.c.l.b16 %v46
    %v95 = vunpack.c.l.b16 %v47
    %v96 = vunpack.c.l.b16 %v48
    %v97 = vunpack.c.l.b16 %v49
    %v98 = vunpack.c.l.b16 %v50
    %v99 = vunpack.c.l.b16 %v51
    %v100 = vunpack.c.l.b16 %v52
    %v101 = vunpack.c.l.b16 %v53
    %v102 = vunpack.c.l.b16 %v54
    %v103 = vunpack.c.l.b16 %v55
    %v104 = vunpack.c.l.b16 %v56
    %v105 = vunpack.c.l.b16 %v57
    %v106 = vunpack.c.l.b16 %v58
    %v107 = vunpack.c.l.b16 %v59
    %v108 = vunpack.c.l.b16 %v60
    %v109 = vpack.c.b16 %v94, %v93
    %v110 = vpack.c.b16 %v96, %v95
    %v111 = vpack.c.b16 %v98, %v97
    %v112 = vpack.c.b16 %v100, %v99
    %v113 = vpack.c.b16 %v102, %v101
    %v114 = vpack.c.b16 %v104, %v103
    %v115 = vpack.c.b16 %v106, %v105
    %v116 = vpack.c.b16 %v108, %v107
    %v141 = vunpack.c.l.b16 %v61
    %v142 = vunpack.c.l.b16 %v62
    %v143 = vunpack.c.l.b16 %v63
    %v144 = vunpack.c.l.b16 %v64
    %v145 = vunpack.c.l.b16 %v65
    %v146 = vunpack.c.l.b16 %v66
    %v147 = vunpack.c.l.b16 %v67
    %v148 = vunpack.c.l.b16 %v68
    %v149 = vunpack.c.l.b16 %v69
    %v150 = vunpack.c.l.b16 %v70
    %v151 = vunpack.c.l.b16 %v71
    %v152 = vunpack.c.l.b16 %v72
    %v153 = vunpack.c.l.b16 %v73
    %v154 = vunpack.c.l.b16 %v74
    %v155 = vunpack.c.l.b16 %v75
    %v156 = vunpack.c.l.b16 %v76
    %v157 = vpack.c.b16 %v142, %v141
    %v158 = vpack.c.b16 %v144, %v143
    %v159 = vpack.c.b16 %v146, %v145
    %v160 = vpack.c.b16 %v148, %v147
    %v161 = vpack.c.b16 %v150, %v149
    %v162 = vpack.c.b16 %v152, %v151
    %v163 = vpack.c.b16 %v154, %v153
    %v164 = vpack.c.b16 %v156, %v155
    %173 = vmatprep.subr.bf16.mxu0 0
    %174 = vmatpush1.bf16.msra.mxu0 %v157
    %175 = vmatprep.subr.bf16.mxu0 0
    %176 = vmatpush1.bf16.msra.mxu0 %v158
    %177 = vmatprep.subr.bf16.mxu0 0
    %178 = vmatpush1.bf16.msra.mxu0 %v159
    %179 = vmatprep.subr.bf16.mxu0 0
    %180 = vmatpush1.bf16.msra.mxu0 %v160
    %181 = vmatprep.subr.bf16.mxu0 0
    %182 = vmatpush1.bf16.msra.mxu0 %v161
    %183 = vmatprep.subr.bf16.mxu0 0
    %184 = vmatpush1.bf16.msra.mxu0 %v162
    %185 = vmatprep.subr.bf16.mxu0 0
    %186 = vmatpush1.bf16.msra.mxu0 %v163
    %187 = vmatprep.subr.bf16.mxu0 0
    %188 = vmatpush1.bf16.msra.mxu0 %v164
    %189 = vmatprep.subr.bf16.mxu0 0
    %190 = vmatpush1.bf16.msra.mxu0 0
    %191 = vmatprep.subr.bf16.mxu0 0
    %192 = vmatpush1.bf16.msra.mxu0 0
    %193 = vmatprep.subr.bf16.mxu0 0
    %194 = vmatpush1.bf16.msra.mxu0 0
    %195 = vmatprep.subr.bf16.mxu0 0
    %196 = vmatpush1.bf16.msra.mxu0 0
    %197 = vmatprep.subr.bf16.mxu0 0
    %198 = vmatpush1.bf16.msra.mxu0 0
    %199 = vmatprep.subr.bf16.mxu0 0
    %200 = vmatpush1.bf16.msra.mxu0 0
    %201 = vmatprep.subr.bf16.mxu0 0
    %202 = vmatpush1.bf16.msra.mxu0 0
    %203 = vmatprep.subr.bf16.mxu0 0
    %204 = vmatpush1.bf16.msra.mxu0 0
    %205 = vmatprep.mubr.bf16.mxu0 0
    %206 = vmatmul.mubr.bf16.gmra.mrb[0].mxu0 %v109
    %v207 = vpop.f32.mrb[0].mxu0
    %v208 = vadd.f32 0.0, %v207
    %v209 = vpop.f32.mrb[0].mxu0
    %v210 = vpop.f32.mrb[0].mxu0
    %v211 = vadd.f32 0.0, %v210
    %v212 = vpop.f32.mrb[0].mxu0
    %213 = vmatprep.mubr.bf16.mxu0 0
    %214 = vmatmul.mubr.bf16.gmra.mrb[0].mxu0 %v110
    %v215 = vpop.f32.mrb[0].mxu0
    %v216 = vadd.f32 0.0, %v215
    %v217 = vpop.f32.mrb[0].mxu0
    %v218 = vpop.f32.mrb[0].mxu0
    %v219 = vadd.f32 0.0, %v218
    %v220 = vpop.f32.mrb[0].mxu0
    %221 = vmatprep.mubr.bf16.mxu0 0
    %222 = vmatmul.mubr.bf16.gmra.mrb[0].mxu0 %v111
    %v223 = vpop.f32.mrb[0].mxu0
    %v224 = vadd.f32 0.0, %v223
    %v225 = vpop.f32.mrb[0].mxu0
    %v226 = vpop.f32.mrb[0].mxu0
    %v227 = vadd.f32 0.0, %v226
    %v228 = vpop.f32.mrb[0].mxu0
    %229 = vmatprep.mubr.bf16.mxu0 0
    %230 = vmatmul.mubr.bf16.gmra.mrb[0].mxu0 %v112
    %v231 = vpop.f32.mrb[0].mxu0
    %v232 = vadd.f32 0.0, %v231
    %v233 = vpop.f32.mrb[0].mxu0
    %v234 = vpop.f32.mrb[0].mxu0
    %v235 = vadd.f32 0.0, %v234
    %v236 = vpop.f32.mrb[0].mxu0
    %237 = vmatprep.mubr.bf16.mxu0 0
    %238 = vmatmul.mubr.bf16.gmra.mrb[0].mxu0 %v113
    %v239 = vpop.f32.mrb[0].mxu0
    %v240 = vadd.f32 0.0, %v239
    %v241 = vpop.f32.mrb[0].mxu0
    %v242 = vpop.f32.mrb[0].mxu0
    %v243 = vadd.f32 0.0, %v242
    %v244 = vpop.f32.mrb[0].mxu0
    %245 = vmatprep.mubr.bf16.mxu0 0
    %246 = vmatmul.mubr.bf16.gmra.mrb[0].mxu0 %v114
    %v247 = vpop.f32.mrb[0].mxu0
    %v248 = vadd.f32 0.0, %v247
    %v249 = vpop.f32.mrb[0].mxu0
    %v250 = vpop.f32.mrb[0].mxu0
    %v251 = vadd.f32 0.0, %v250
    %v252 = vpop.f32.mrb[0].mxu0
    %253 = vmatprep.mubr.bf16.mxu0 0
    %254 = vmatmul.mubr.bf16.gmra.mrb[0].mxu0 %v115
    %v255 = vpop.f32.mrb[0].mxu0
    %v256 = vadd.f32 0.0, %v255
    %v257 = vpop.f32.mrb[0].mxu0
    %v258 = vpop.f32.mrb[0].mxu0
    %v259 = vadd.f32 0.0, %v258
    %v260 = vpop.f32.mrb[0].mxu0
    %261 = vmatprep.mubr.bf16.mxu0 0
    %262 = vmatmul.mubr.bf16.gmra.mrb[0].mxu0 %v116
    %v263 = vpop.f32.mrb[0].mxu0
    %v264 = vadd.f32 0.0, %v263
    %v265 = vpop.f32.mrb[0].mxu0
    %v266 = vpop.f32.mrb[0].mxu0
    %v267 = vadd.f32 0.0, %v266
    %v268 = vpop.f32.mrb[0].mxu0
    %269 = vdwg.mxu0
    %vm270 = vcmp.ge.f32.partialorder %v208, 0.0
    %vm271 = vcmp.ge.f32.partialorder %v211, 0.0
    %vm272 = vcmp.ge.f32.partialorder %v216, 0.0
    %vm273 = vcmp.ge.f32.partialorder %v219, 0.0
    %vm274 = vcmp.ge.f32.partialorder %v224, 0.0
    %vm275 = vcmp.ge.f32.partialorder %v227, 0.0
    %vm276 = vcmp.ge.f32.partialorder %v232, 0.0
    %vm277 = vcmp.ge.f32.partialorder %v235, 0.0
    %vm278 = vcmp.ge.f32.partialorder %v240, 0.0
    %vm279 = vcmp.ge.f32.partialorder %v243, 0.0
    %vm280 = vcmp.ge.f32.partialorder %v248, 0.0
    %vm281 = vcmp.ge.f32.partialorder %v251, 0.0
    %vm282 = vcmp.ge.f32.partialorder %v256, 0.0
    %vm283 = vcmp.ge.f32.partialorder %v259, 0.0
    %vm284 = vcmp.ge.f32.partialorder %v264, 0.0
    %vm285 = vcmp.ge.f32.partialorder %v267, 0.0
    %v286 = vmul.f32 %v208, 0.2
    %v287 = vmul.f32 %v211, 0.2
    %v288 = vmul.f32 %v216, 0.2
    %v289 = vmul.f32 %v219, 0.2
    %v290 = vmul.f32 %v224, 0.2
    %v291 = vmul.f32 %v227, 0.2
    %v292 = vmul.f32 %v232, 0.2
    %v293 = vmul.f32 %v235, 0.2
    %v294 = vmul.f32 %v240, 0.2
    %v295 = vmul.f32 %v243, 0.2
    %v296 = vmul.f32 %v248, 0.2
    %v297 = vmul.f32 %v251, 0.2
    %v298 = vmul.f32 %v256, 0.2
    %v299 = vmul.f32 %v259, 0.2
    %v300 = vmul.f32 %v264, 0.2
    %v301 = vmul.f32 %v267, 0.2
    %v302 = vsel %vm270, %v208, %v286
    %v303 = vsel %vm271, %v211, %v287
    %v304 = vsel %vm272, %v216, %v288
    %v305 = vsel %vm273, %v219, %v289
    %v306 = vsel %vm274, %v224, %v290
    %v307 = vsel %vm275, %v227, %v291
    %v308 = vsel %vm276, %v232, %v292
    %v309 = vsel %vm277, %v235, %v293
    %v310 = vsel %vm278, %v240, %v294
    %v311 = vsel %vm279, %v243, %v295
    %v312 = vsel %vm280, %v248, %v296
    %v313 = vsel %vm281, %v251, %v297
    %v314 = vsel %vm282, %v256, %v298
    %v315 = vsel %vm283, %v259, %v299
    %v316 = vsel %vm284, %v264, %v300
    %v317 = vsel %vm285, %v267, %v301
    %v318 = vpack.c.bf16 %v303, %v302
    %v319 = vpack.c.bf16 %v305, %v304
    %v320 = vpack.c.bf16 %v307, %v306
    %v321 = vpack.c.bf16 %v309, %v308
    %v322 = vpack.c.bf16 %v311, %v310
    %v323 = vpack.c.bf16 %v313, %v312
    %v324 = vpack.c.bf16 %v315, %v314
    %v325 = vpack.c.bf16 %v317, %v316
    %v334 = vunpack.c.l.b16 %v318
    %v335 = vunpack.c.h.b16 %v318
    %v336 = vunpack.c.l.b16 %v319
    %v337 = vunpack.c.h.b16 %v319
    %v338 = vunpack.c.l.b16 %v320
    %v339 = vunpack.c.h.b16 %v320
    %v340 = vunpack.c.l.b16 %v321
    %v341 = vunpack.c.h.b16 %v321
    %v342 = vunpack.c.l.b16 %v322
    %v343 = vunpack.c.h.b16 %v322
    %v344 = vunpack.c.l.b16 %v323
    %v345 = vunpack.c.h.b16 %v323
    %v346 = vunpack.c.l.b16 %v324
    %v347 = vunpack.c.h.b16 %v324
    %v348 = vunpack.c.l.b16 %v325
    %v349 = vunpack.c.h.b16 %v325
    %v350 = vpack.c.b16 %v334, %v334
    %v351 = vpack.c.b16 %v335, %v335
    %v352 = vpack.c.b16 %v336, %v336
    %v353 = vpack.c.b16 %v337, %v337
    %v354 = vpack.c.b16 %v338, %v338
    %v355 = vpack.c.b16 %v339, %v339
    %v356 = vpack.c.b16 %v340, %v340
    %v357 = vpack.c.b16 %v341, %v341
    %v358 = vpack.c.b16 %v342, %v342
    %v359 = vpack.c.b16 %v343, %v343
    %v360 = vpack.c.b16 %v344, %v344
    %v361 = vpack.c.b16 %v345, %v345
    %v362 = vpack.c.b16 %v346, %v346
    %v363 = vpack.c.b16 %v347, %v347
    %v364 = vpack.c.b16 %v348, %v348
    %v365 = vpack.c.b16 %v349, %v349
    %382 = vst [vmem:[#allocation7] sm:$0xf] %v350
    %383 = vst [vmem:[#allocation7 + $0x4] sm:$0xf] %v351
    %384 = vst [vmem:[#allocation7 + $0x8] sm:$0xf] %v352
    %385 = vst [vmem:[#allocation7 + $0xc] sm:$0xf] %v353
    %386 = vst [vmem:[#allocation7 + $0x10] sm:$0xf] %v354
    %387 = vst [vmem:[#allocation7 + $0x14] sm:$0xf] %v355
    %388 = vst [vmem:[#allocation7 + $0x18] sm:$0xf] %v356
    %389 = vst [vmem:[#allocation7 + $0x1c] sm:$0xf] %v357
    %390 = vst [vmem:[#allocation7 + $0x20] sm:$0xf] %v358
    %391 = vst [vmem:[#allocation7 + $0x24] sm:$0xf] %v359
    %392 = vst [vmem:[#allocation7 + $0x28] sm:$0xf] %v360
    %393 = vst [vmem:[#allocation7 + $0x2c] sm:$0xf] %v361
    %394 = vst [vmem:[#allocation7 + $0x30] sm:$0xf] %v362
    %395 = vst [vmem:[#allocation7 + $0x34] sm:$0xf] %v363
    %396 = vst [vmem:[#allocation7 + $0x38] sm:$0xf] %v364
    %397 = vst [vmem:[#allocation7 + $0x3c] sm:$0xf] %v365
    %v398 = vadd.f32 %v302, %v303
    %v399 = vadd.f32 %v398, %v304
    %v400 = vadd.f32 %v399, %v305
    %v401 = vadd.f32 %v400, %v306
    %v402 = vadd.f32 %v401, %v307
    %v403 = vadd.f32 %v402, %v308
    %v404 = vadd.f32 %v403, %v309
    %v405 = vadd.f32 %v404, %v310
    %v406 = vadd.f32 %v405, %v311
    %v407 = vadd.f32 %v406, %v312
    %v408 = vadd.f32 %v407, %v313
    %v409 = vadd.f32 %v408, %v314
    %v410 = vadd.f32 %v409, %v315
    %v411 = vadd.f32 %v410, %v316
    %v412 = vadd.f32 %v411, %v317
    %v413 = vrot.slane %v412, 4
    %v414 = vadd.f32 %v412, %v413
    %v415 = vrot.slane %v414, 2
    %v416 = vadd.f32 %v414, %v415
    %v417 = vrot.slane %v416, 1
    %v418 = vadd.f32 %v416, %v417
    %419 = vst [vmem:[#allocation8] sm:$0x1] %v418
    %v420 = vmul.f32 %v302, %v302
    %v421 = vmul.f32 %v303, %v303
    %v422 = vmul.f32 %v304, %v304
    %v423 = vmul.f32 %v305, %v305
    %v424 = vmul.f32 %v306, %v306
    %v425 = vmul.f32 %v307, %v307
    %v426 = vmul.f32 %v308, %v308
    %v427 = vmul.f32 %v309, %v309
    %v428 = vmul.f32 %v310, %v310
    %v429 = vmul.f32 %v311, %v311
    %v430 = vmul.f32 %v312, %v312
    %v431 = vmul.f32 %v313, %v313
    %v432 = vmul.f32 %v314, %v314
    %v433 = vmul.f32 %v315, %v315
    %v434 = vmul.f32 %v316, %v316
    %v435 = vmul.f32 %v317, %v317
    %v436 = vadd.f32 %v420, %v421
    %v437 = vadd.f32 %v436, %v422
    %v438 = vadd.f32 %v437, %v423
    %v439 = vadd.f32 %v438, %v424
    %v440 = vadd.f32 %v439, %v425
    %v441 = vadd.f32 %v440, %v426
    %v442 = vadd.f32 %v441, %v427
    %v443 = vadd.f32 %v442, %v428
    %v444 = vadd.f32 %v443, %v429
    %v445 = vadd.f32 %v444, %v430
    %v446 = vadd.f32 %v445, %v431
    %v447 = vadd.f32 %v446, %v432
    %v448 = vadd.f32 %v447, %v433
    %v449 = vadd.f32 %v448, %v434
    %v450 = vadd.f32 %v449, %v435
    %v451 = vrot.slane %v450, 4
    %v452 = vadd.f32 %v450, %v451
    %v453 = vrot.slane %v452, 2
    %v454 = vadd.f32 %v452, %v453
    %v455 = vrot.slane %v454, 1
    %v456 = vadd.f32 %v454, %v455
    %457 = vst [vmem:[#allocation10] sm:$0x1] %v456
    // Predicated region
    $region18: #{tpu_custom_call.1} parent=1 // pred_check
      _
    $region19: #{tpu_custom_call.1} parent=1 // pred_check_branch
      %459 = sbr.rel (0) target = $region21
    $region20: #{tpu_custom_call.1} parent=1 // pred_region
      %s461 = ssub.s32 1024, 1024
      %462 = vsyncadd [#allocation4], %s461
      %s463 = sshll.u32 [#allocation7], 4
      %s464 = int_to_ptr.vmem [resolvable:$true] %s463
      %469 = dma.vmem_to_hbm [thread:$0]  %s464, 1024, %s2, [#allocation4], 64, 64, 4
    $region21: #{tpu_custom_call.1} parent=1 // pred_fallthru
      _
    // Predicated region
    $region22: #{tpu_custom_call.1} parent=1 // pred_check
      _
    $region23: #{tpu_custom_call.1} parent=1 // pred_check_branch
      %471 = sbr.rel (0) target = $region25
    $region24: #{tpu_custom_call.1} parent=1 // pred_region
      %s473 = ssub.s32 16, 16
      %474 = vsyncadd [#allocation9], %s473
      %s476 = sshll.u32 [#allocation8], 4
      %s477 = int_to_ptr.vmem [resolvable:$true] %s476
      %479 = dma.vmem_to_hbm [thread:$0]  %s477, 16, %s3, [#allocation9]
    $region25: #{tpu_custom_call.1} parent=1 // pred_fallthru
      _
    // Predicated region
    $region26: #{tpu_custom_call.1} parent=1 // pred_check
      _
    $region27: #{tpu_custom_call.1} parent=1 // pred_check_branch
      %481 = sbr.rel (0) target = $region29
    $region28: #{tpu_custom_call.1} parent=1 // pred_region
      %s483 = ssub.s32 16, 16
      %484 = vsyncadd [#allocation9], %s483
      %s486 = sshll.u32 [#allocation10], 4
      %s487 = int_to_ptr.vmem [resolvable:$true] %s486
      %489 = dma.vmem_to_hbm [thread:$0]  %s487, 16, %s4, [#allocation9]
    $region29: #{tpu_custom_call.1} parent=1 // pred_fallthru
      _
    // Predicated region
    $region30: #{tpu_custom_call.1} parent=1 // pred_check
      _
    $region31: #{tpu_custom_call.1} parent=1 // pred_check_branch
      %491 = sbr.rel (0) target = $region33
    $region32: #{tpu_custom_call.1} parent=1 // pred_region
      %492 = dma.done [#allocation4], 1024
    $region33: #{tpu_custom_call.1} parent=1 // pred_fallthru
      _
    // Predicated region
    $region34: #{tpu_custom_call.1} parent=1 // pred_check
      _
    $region35: #{tpu_custom_call.1} parent=1 // pred_check_branch
      %494 = sbr.rel (0) target = $region37
    $region36: #{tpu_custom_call.1} parent=1 // pred_region
      %495 = dma.done [#allocation9], 16
    $region37: #{tpu_custom_call.1} parent=1 // pred_fallthru
      _
    // Predicated region
    $region38: #{tpu_custom_call.1} parent=1 // pred_check
      _
    $region39: #{tpu_custom_call.1} parent=1 // pred_check_branch
      %497 = sbr.rel (0) target = $region41
    $region40: #{tpu_custom_call.1} parent=1 // pred_region
      %498 = dma.done [#allocation9], 16
    $region41: #{tpu_custom_call.1} parent=1 // pred_fallthru
      _
    %499 = vsyncpa [#allocation3], 1
    %500 = vsyncpa [#allocation6], 1
    %501 = vsyncpa [#allocation4], 1
    %502 = vsyncpa [#allocation9], 1

</llo_original>
